<compile_context>
chip_gen: v7x
topology: tpu7x:2x2x1
jax: 0.10.0
libtpu: 0.0.40
codegen_flags: <defaults>
</compile_context>

<pallas_src>
import functools

import jax
import jax.numpy as jnp
from jax import lax
from jax.experimental import pallas as pl
from jax.experimental.pallas import tpu as pltpu


# ----------------------------------------------------------------------------
# Kernel
# ----------------------------------------------------------------------------
def _gated_conv_kernel(x_ref, w_ref, b_ref, o_ref, *, block_h, width, channels,
                       taps, compute_dtype):
    """One (batch, row-tile) grid step.

    x_ref : (1, 1, block_h+2, W+2, C)  relu'd, zero-padded halo row slab
    w_ref : (9C, 2C)                   im2col-flattened conv weight (resident)
    b_ref : (1, 2C)                    conv bias (f32, resident)
    o_ref : (1, block_h, W, C)         gated output tile (NHWC)
    """
    th, w, c = block_h, width, channels
    slab = x_ref[0, 0]                                  # (th+2, W+2, C)

    # Hoist the 3 column (sublane-axis) shifts once; reuse across the 3 row
    # shifts -> 3 relayouts instead of 9.
    cols = [slab[:, dj:dj + w, :] for dj in range(taps)]          # (th+2, w, c)

    # Build the (th*w, 9C) im2col patch: tap order (di, dj, ci) matches the
    # wrapper's weight reshape (kh, kw, C, 2C) -> (9C, 2C).
    parts = []
    for di in range(taps):
        for dj in range(taps):
            parts.append(cols[dj][di:di + th])                    # (th, w, c)
    patch = jnp.concatenate(parts, axis=-1)                       # (th, w, 9c)
    patch = patch.reshape(th * w, taps * taps * c).astype(compute_dtype)

    # Single fused (M, 9C) x (9C, 2C) MXU pass, f32 accumulation, bias folded
    # into the epilogue add (no zero-init / per-tap accumulator passes).
    y = jnp.dot(patch, w_ref[...], preferred_element_type=jnp.float32)
    y = y + b_ref[...]                                            # (th*w, 2c)

    a = y[:, :c]                          # torch.chunk half 0 ("x")
    g = y[:, c:]                          # torch.chunk half 1 (gate)
    out = a * jax.nn.sigmoid(g)           # VPU mul + EUP sigmoid
    o_ref[...] = out.reshape(1, th, w, c).astype(o_ref.dtype)


# ----------------------------------------------------------------------------
# Tiling / VMEM helpers (all static, trace-time Python)
# ----------------------------------------------------------------------------
def _vmem_capacity_bytes():
    try:
        return int(pltpu.get_tpu_info().vmem_capacity_bytes)
    except Exception:
        return 64 * 1024 * 1024        # conservative (v7x per-TC) fallback


def _default_target_rows(vmem_cap):
    # ~1024 pixel-rows per tile on 128 MiB v5e/v6e, ~512 on 64 MiB v7x.
    return 1024 if vmem_cap >= 96 * 1024 * 1024 else 512


def _step_bytes(block_h, w, wp, c, taps, compute_itemsize):
    """Per-grid-step VMEM footprint estimate (double-buffered blocks + temps)."""
    halo_h = block_h + taps - 1
    in_block = halo_h * wp * c * compute_itemsize
    out_block = block_h * w * c * 4
    w_block = taps * taps * c * 2 * c * compute_itemsize
    b_block = 2 * c * 4
    patch = block_h * w * taps * taps * c * compute_itemsize
    acc = block_h * w * 2 * c * 4
    return 2 * in_block + 2 * out_block + 2 * w_block + 2 * b_block \
        + 2 * (patch + acc)


def _pick_block_h(h, w, wp, c, taps, compute_itemsize, target_rows, vmem_cap):
    """Largest divisor of H (preferring sublane-aligned) that fits the budget."""
    divs = [d for d in range(1, h + 1) if h % d == 0]
    aligned = [d for d in divs if d % 8 == 0 or d == h]
    cands = sorted(aligned or divs, reverse=True)
    budget = int(vmem_cap * 0.5)
    for d in cands:
        if d * w <= target_rows and \
                _step_bytes(d, w, wp, c, taps, compute_itemsize) <= budget:
            return d
    return cands[-1]


def _vmem_limit_bytes(block_h, w, wp, c, taps, compute_itemsize, vmem_cap):
    need = _step_bytes(block_h, w, wp, c, taps, compute_itemsize)
    limit = need + 16 * 1024 * 1024                     # headroom
    cap = max(32 * 1024 * 1024, (vmem_cap * 3) // 4)    # <= 3/4 of physical
    return int(min(max(limit, 32 * 1024 * 1024), cap))


# ----------------------------------------------------------------------------
# Wrapper
# ----------------------------------------------------------------------------
@functools.partial(jax.jit,
                   static_argnames=("kernel_size", "block_h", "target_rows",
                                    "use_bf16"))
def gated_residual_block(x_nchw, weight_hwio, bias, kernel_size=3,
                         block_h=None, target_rows=None, use_bf16=False):
    """x_nchw: (N, C, H, W) f32; weight_hwio: (k, k, C, 2C); bias: (2C,)."""
    n, c, h, w = x_nchw.shape
    kh, kw, cin, cout = weight_hwio.shape
    assert kernel_size == 3, "module hard-codes padding=1 (SAME only for k=3)"
    assert kh == kernel_size and kw == kernel_size
    assert cin == c and cout == 2 * c
    pad = 1
    taps = kernel_size

    compute_dtype = jnp.bfloat16 if use_bf16 else jnp.float32
    compute_itemsize = jnp.dtype(compute_dtype).itemsize

    hp, wp = h + 2 * pad, w + 2 * pad
    vmem_cap = _vmem_capacity_bytes()
    if target_rows is None:
        target_rows = _default_target_rows(vmem_cap)
    if block_h is None:
        block_h = _pick_block_h(h, w, wp, c, taps, compute_itemsize,
                                target_rows, vmem_cap)
    assert h % block_h == 0, "block_h must divide H"
    num_tiles = h // block_h
    halo_h = block_h + 2 * pad

    # --- wrapper glue (fused XLA): relu -> NHWC -> zero pad -> halo slabs ---
    # relu-before-pad == relu-after-pad because zero padding is a ReLU fixed
    # point. Activations stored in the compute dtype (bf16 path halves the
    # activation DMA bytes; accumulation stays f32 in-kernel).
    # TODO(synk): accepting/returning NHWC at the module boundary would remove
    # the two wrapper transposes (a full HBM round trip each for small C).
    x_nhwc = jnp.transpose(jnp.maximum(x_nchw, 0.0), (0, 2, 3, 1))
    x_pad = jnp.pad(x_nhwc, ((0, 0), (pad, pad), (pad, pad), (0, 0)))
    x_pad = x_pad.astype(compute_dtype)

    # Overlapping halo row slabs: (N, T, block_h+2, W+2, C). Only ~2/block_h
    # extra HBM bytes, but the per-step VMEM-resident input is just one slab.
    row_idx = (jnp.arange(num_tiles)[:, None] * block_h
               + jnp.arange(halo_h)[None, :])              # (T, block_h+2)
    x_slabs = x_pad[:, row_idx]                            # (N,T,bh+2,W+2,C)

    # im2col-flattened weights: (kh, kw, C, 2C) -> (9C, 2C). Both conv halves
    # (a + gate) fused into one 2C-wide output so activations stream through
    # the MXU once.
    w_flat = weight_hwio.reshape(kh * kw * c, 2 * c).astype(compute_dtype)
    b2d = bias.reshape(1, 2 * c).astype(jnp.float32)

    grid = (n, num_tiles)     # keep total steps even on v7x (2 TCs)
    m = n * h * w
    kernel = functools.partial(
        _gated_conv_kernel, block_h=block_h, width=w, channels=c,
        taps=taps, compute_dtype=compute_dtype)

    out_nhwc = pl.pallas_call(
        kernel,
        grid=grid,
        in_specs=[
            # halo slab for this (batch, row-tile): pipelined by BlockSpec.
            pl.BlockSpec((1, 1, halo_h, wp, c), lambda i, t: (i, t, 0, 0, 0)),
            # weights / bias: constant index map -> VMEM-resident.
            pl.BlockSpec((kh * kw * c, 2 * c), lambda i, t: (0, 0)),
            pl.BlockSpec((1, 2 * c), lambda i, t: (0, 0)),
        ],
        out_specs=pl.BlockSpec((1, block_h, w, c), lambda i, t: (i, t, 0, 0)),
        out_shape=jax.ShapeDtypeStruct((n, h, w, c), jnp.float32),
        compiler_params=pltpu.CompilerParams(
            dimension_semantics=("parallel", "parallel"),
            vmem_limit_bytes=_vmem_limit_bytes(block_h, w, wp, c, taps,
                                               compute_itemsize, vmem_cap)),
        cost_estimate=pl.CostEstimate(
            flops=2 * m * (taps * taps * c) * (2 * c),
            transcendentals=m * c,
            bytes_accessed=(x_slabs.size * compute_itemsize
                            + w_flat.size * compute_itemsize
                            + b2d.size * 4 + m * c * 4)),
    )(x_slabs, w_flat, b2d)

    # back to the module's NCHW layout
    return jnp.transpose(out_nhwc, (0, 3, 1, 2))


# ----------------------------------------------------------------------------
# Pure-JAX reference (mirrors the PyTorch forward) for validation
# ----------------------------------------------------------------------------
def _reference(x_nchw, weight_hwio, bias):
    w_oihw = jnp.transpose(weight_hwio, (3, 2, 0, 1))     # (2C, C, kh, kw)
    y = lax.conv_general_dilated(
        jnp.maximum(x_nchw, 0.0), w_oihw, window_strides=(1, 1),
        padding=[(1, 1), (1, 1)],
        dimension_numbers=("NCHW", "OIHW", "NCHW"))
    y = y + bias.reshape(1, -1, 1, 1)
    c = x_nchw.shape[1]
    a, g = y[:, :c], y[:, c:]
    return a * jax.nn.sigmoid(g)


if __name__ == "__main__":
    N, C, H, W = 2, 4, 16, 16
    K = 3

    key = jax.random.PRNGKey(0)
    kx, kw_, kb = jax.random.split(key, 3)
    x = jax.random.normal(kx, (N, C, H, W), dtype=jnp.float32)
    # deterministic synthetic parameters (Conv2d: C -> 2C, 3x3), HWIO layout
    weight = jax.random.normal(kw_, (K, K, C, 2 * C), dtype=jnp.float32) * 0.1
    bias = jax.random.normal(kb, (2 * C,), dtype=jnp.float32) * 0.1

    ref = jax.block_until_ready(_reference(x, weight, bias))

    # f32 MXU path, explicit 2 row-tiles per image (exercises the 2x2 grid and
    # the halo-slab path).
    out = jax.block_until_ready(
        gated_residual_block(x, weight, bias, kernel_size=K, block_h=8))
    assert out.shape == (N, C, H, W)
    assert jnp.allclose(out, ref, atol=1e-5, rtol=1e-5), "f32 mismatch vs reference"

    # bf16 activations/weights in HBM, f32 accumulation/bias/gating, auto tile.
    out_bf16 = jax.block_until_ready(
        gated_residual_block(x, weight, bias, kernel_size=K, use_bf16=True))
    assert jnp.allclose(out_bf16, ref, atol=5e-2, rtol=5e-2), "bf16 mismatch vs reference"

    print("KERNEL_OK")
</pallas_src>

<mosaic_0001>
module attributes {stable_mosaic.version = 11 : i64} {
  func.func @_gated_conv_kernel(%arg0: i32, %arg1: i32, %arg2: memref<1x1x10x18x4xf32, #tpu.memory_space<vmem>>, %arg3: memref<36x8xf32, #tpu.memory_space<vmem>>, %arg4: memref<1x8xf32, #tpu.memory_space<vmem>>, %arg5: memref<1x8x16x4xf32, #tpu.memory_space<vmem>>) attributes {dimension_semantics = [#tpu.dimension_semantics<parallel>, #tpu.dimension_semantics<parallel>], iteration_bounds = array<i64: 2, 2>, scalar_prefetch = 0 : i64, scratch_operands = 0 : i64, tpu.core_type = #tpu.core_type<tc>, window_params = [{transform_indices = @transform_0, window_bounds = array<i64: 1, 1, 10, 18, 4>}, {pipeline_mode = #tpu.pipeline_mode<synchronous>, transform_indices = @transform_1, window_bounds = array<i64: 36, 8>}, {pipeline_mode = #tpu.pipeline_mode<synchronous>, transform_indices = @transform_2, window_bounds = array<i64: 1, 8>}, {transform_indices = @transform_3, window_bounds = array<i64: 1, 8, 16, 4>}]} {
    %c0 = arith.constant 0 : index
    %c0_0 = arith.constant 0 : index
    %c0_1 = arith.constant 0 : index
    %c0_2 = arith.constant 0 : index
    %c0_3 = arith.constant 0 : index
    %0 = vector.load %arg2[%c0, %c0_0, %c0_1, %c0_2, %c0_3] : memref<1x1x10x18x4xf32, #tpu.memory_space<vmem>>, vector<1x1x10x18x4xf32>
    %1 = vector.shape_cast %0 : vector<1x1x10x18x4xf32> to vector<10x18x4xf32>
    %2 = vector.extract_strided_slice %1 {offsets = [0, 0, 0], sizes = [10, 16, 4], strides = [1, 1, 1]} : vector<10x18x4xf32> to vector<10x16x4xf32>
    %3 = vector.extract_strided_slice %1 {offsets = [0, 1, 0], sizes = [10, 16, 4], strides = [1, 1, 1]} : vector<10x18x4xf32> to vector<10x16x4xf32>
    %4 = vector.extract_strided_slice %1 {offsets = [0, 2, 0], sizes = [10, 16, 4], strides = [1, 1, 1]} : vector<10x18x4xf32> to vector<10x16x4xf32>
    %5 = vector.extract_strided_slice %2 {offsets = [0, 0, 0], sizes = [8, 16, 4], strides = [1, 1, 1]} : vector<10x16x4xf32> to vector<8x16x4xf32>
    %6 = vector.extract_strided_slice %3 {offsets = [0, 0, 0], sizes = [8, 16, 4], strides = [1, 1, 1]} : vector<10x16x4xf32> to vector<8x16x4xf32>
    %7 = vector.extract_strided_slice %4 {offsets = [0, 0, 0], sizes = [8, 16, 4], strides = [1, 1, 1]} : vector<10x16x4xf32> to vector<8x16x4xf32>
    %8 = vector.extract_strided_slice %2 {offsets = [1, 0, 0], sizes = [8, 16, 4], strides = [1, 1, 1]} : vector<10x16x4xf32> to vector<8x16x4xf32>
    %9 = vector.extract_strided_slice %3 {offsets = [1, 0, 0], sizes = [8, 16, 4], strides = [1, 1, 1]} : vector<10x16x4xf32> to vector<8x16x4xf32>
    %10 = vector.extract_strided_slice %4 {offsets = [1, 0, 0], sizes = [8, 16, 4], strides = [1, 1, 1]} : vector<10x16x4xf32> to vector<8x16x4xf32>
    %11 = vector.extract_strided_slice %2 {offsets = [2, 0, 0], sizes = [8, 16, 4], strides = [1, 1, 1]} : vector<10x16x4xf32> to vector<8x16x4xf32>
    %12 = vector.extract_strided_slice %3 {offsets = [2, 0, 0], sizes = [8, 16, 4], strides = [1, 1, 1]} : vector<10x16x4xf32> to vector<8x16x4xf32>
    %13 = vector.extract_strided_slice %4 {offsets = [2, 0, 0], sizes = [8, 16, 4], strides = [1, 1, 1]} : vector<10x16x4xf32> to vector<8x16x4xf32>
    %14 = tpu.concatenate %5, %6, %7, %8, %9, %10, %11, %12, %13 in 2 : vector<8x16x4xf32>, vector<8x16x4xf32>, vector<8x16x4xf32>, vector<8x16x4xf32>, vector<8x16x4xf32>, vector<8x16x4xf32>, vector<8x16x4xf32>, vector<8x16x4xf32>, vector<8x16x4xf32> -> vector<8x16x36xf32>
    %15 = vector.shape_cast %14 : vector<8x16x36xf32> to vector<128x36xf32>
    %c0_4 = arith.constant 0 : index
    %c0_5 = arith.constant 0 : index
    %16 = vector.load %arg3[%c0_4, %c0_5] : memref<36x8xf32, #tpu.memory_space<vmem>>, vector<36x8xf32>
    %cst = arith.constant dense<0.000000e+00> : vector<128x8xf32>
    %17 = tpu.matmul %15, %16, %cst {dimension_numbers = #tpu.dot_dimension_numbers<[1], [0], [0], [1], [0, 0, 1, 1], [], []>} : vector<128x36xf32>, vector<36x8xf32>, vector<128x8xf32> -> vector<128x8xf32>
    %c0_6 = arith.constant 0 : index
    %c0_7 = arith.constant 0 : index
    %18 = vector.load %arg4[%c0_6, %c0_7] : memref<1x8xf32, #tpu.memory_space<vmem>>, vector<1x8xf32>
    %19 = vector.broadcast %18 : vector<1x8xf32> to vector<128x8xf32>
    %20 = arith.addf %17, %19 : vector<128x8xf32>
    %21 = vector.extract_strided_slice %20 {offsets = [0, 0], sizes = [128, 4], strides = [1, 1]} : vector<128x8xf32> to vector<128x4xf32>
    %22 = vector.extract_strided_slice %20 {offsets = [0, 4], sizes = [128, 4], strides = [1, 1]} : vector<128x8xf32> to vector<128x4xf32>
    %23 = arith.negf %22 : vector<128x4xf32>
    %24 = math.exp %23 : vector<128x4xf32>
    %cst_8 = arith.constant 1.000000e+00 : f32
    %25 = vector.broadcast %cst_8 : f32 to vector<128x4xf32>
    %26 = arith.addf %25, %24 : vector<128x4xf32>
    %27 = arith.divf %25, %26 : vector<128x4xf32>
    %28 = arith.mulf %21, %27 : vector<128x4xf32>
    %29 = vector.shape_cast %28 : vector<128x4xf32> to vector<1x8x16x4xf32>
    %c0_9 = arith.constant 0 : index
    %c0_10 = arith.constant 0 : index
    %c0_11 = arith.constant 0 : index
    %c0_12 = arith.constant 0 : index
    %30 = vector.load %arg5[%c0_9, %c0_10, %c0_11, %c0_12] : memref<1x8x16x4xf32, #tpu.memory_space<vmem>>, vector<1x8x16x4xf32>
    tpu.vector_store %arg5[%c0_9, %c0_10, %c0_11, %c0_12], %29 {strides = array<i32>} : memref<1x8x16x4xf32, #tpu.memory_space<vmem>>, vector<1x8x16x4xf32>,
    return
  }
  func.func @transform_0(%arg0: i32, %arg1: i32) -> (i32, i32, i32, i32, i32) {
    %c0_i32 = arith.constant 0 : i32
    %c0_i32_0 = arith.constant 0 : i32
    %c0_i32_1 = arith.constant 0 : i32
    %c0_i32_2 = arith.constant 0 : i32
    return %arg0, %arg1, %c0_i32, %c0_i32_0, %c0_i32_1 : i32, i32, i32, i32, i32
  }
  func.func @transform_1(%arg0: i32, %arg1: i32) -> (i32, i32) {
    %c0_i32 = arith.constant 0 : i32
    %c0_i32_0 = arith.constant 0 : i32
    %c0_i32_1 = arith.constant 0 : i32
    return %c0_i32, %c0_i32_0 : i32, i32
  }
  func.func @transform_2(%arg0: i32, %arg1: i32) -> (i32, i32) {
    %c0_i32 = arith.constant 0 : i32
    %c0_i32_0 = arith.constant 0 : i32
    %c0_i32_1 = arith.constant 0 : i32
    return %c0_i32, %c0_i32_0 : i32, i32
  }
  func.func @transform_3(%arg0: i32, %arg1: i32) -> (i32, i32, i32, i32) {
    %c0_i32 = arith.constant 0 : i32
    %c0_i32_0 = arith.constant 0 : i32
    %c0_i32_1 = arith.constant 0 : i32
    return %arg0, %arg1, %c0_i32, %c0_i32_0 : i32, i32, i32, i32
  }
}

</mosaic_0001>

<llo_original>
// kernel: gated_residual_block.1
$region0: #{gated_residual_block.1}
  #allocation0 [shape = 'u32[]', space=smem, size = 0x4, offset = 0x4, fixed_abs, tag = 'smem constant byte address 0x4 - core index']
  #allocation1 [shape = 'u32[144,128]{1,0:T(1,128)}', space=vmem, size = 0x12000, scoped, tag = 'internal scratch']
  %s0 = inlined_call_operand.vmem [shape: f32[2,2,10,18,4], index: 0, kind: input, shape index: {}]
  %s1 = inlined_call_operand.vmem [shape: f32[36,8], index: 1, kind: input, shape index: {}]
  %s2 = inlined_call_operand.vmem [shape: f32[1,8], index: 2, kind: input, shape index: {}]
  %s3 = inlined_call_operand.vmem [shape: f32[2,16,16,4], index: 3, kind: output, shape index: {}]
  %s4 = sld [smem:[#allocation0]]
  $region45: #{gated_residual_block.1} parent=0
    _
  %s6 = ssub.s32 1, %s4
  %s7 = scalar_select 0, %s6, %s4
  loop: start=0, step=1, limit=6
  $region2: #{gated_residual_block.1} parent=0 // loop_pre_header
    _
  $region3: #{gated_residual_block.1} parent=0 // loop_header
    %s9 = sphi 0, %s13
    %p10 = scmp.ge.s32.totalorder %s9, 6
    %s16 = sphi 0, %s28
    %s17 = sphi 0, %s24
    %s18 = sphi 0, %s16
    %s19 = sphi 0, %s17
    %s20 = sphi 0, %s18
    %s21 = sphi 0, %s19
    %s33 = sphi 0, %s35
    %s36 = sphi 0, %s33
    %s37 = sphi 0, %s36
    %s53 = sphi 0, %s37
    %s57 = sphi 0, %s57
    %s59 = sphi 0, %s57
    %s60 = sphi 0, %s59
    %s74 = sphi 0, %s60
    %s78 = sphi 0, %s78
    %s80 = sphi 0, %s78
    %s81 = sphi 0, %s80
    %s95 = sphi 0, %s81
    %s103 = sphi 0, %s105
    %s106 = sphi 0, %s103
    %s107 = sphi 0, %s106
    %s123 = sphi 0, %s107
  $region4: #{gated_residual_block.1} parent=0 // loop_header_branch
    %12 = sbr.rel (%p10) target = $region8
  $region5: #{gated_residual_block.1} parent=0 // loop_body
    %s14 = ssub.s32 %s9, 1
    %s15 = ssub.s32 %s9, 2
    %s22 = sadd.s32 1, %s17
    %p23 = scmp.ge.s32.totalorder %s22, 2
    %s24 = scalar_select %p23, 0, %s22
    %s25 = sadd.s32 1, %s16
    %s26 = scalar_select %p23, %s25, %s16
    %p27 = scmp.ge.s32.totalorder %s26, 2
    %s28 = scalar_select %p27, 0, %s26
    %s29 = ssub.s32 %s16, %s28
    %s30 = ssub.s32 %s17, %s24
    %s31 = sor.u32 %s29, %s30
    %p32 = scmp.eq.s32.totalorder %s31, 0
    %s34 = sadd.s32 %s33, 1
    %s35 = scalar_select %p32, %s33, %s34
    %p38 = pneg %p32
    %p39 = scmp.eq.s32.totalorder %s9, 3
    %p40 = por %p38, %p39
    %p41 = scmp.ne.s32.totalorder %s33, %s36
    %p42 = scmp.eq.s32.totalorder %s9, 0
    %p43 = por %p41, %p42
    %p44 = scmp.ne.s32.totalorder %s33, %s36
    %p45 = scmp.eq.s32.totalorder %s14, 3
    %p46 = por %p44, %p45
    %p47 = scmp.ne.s32.totalorder %s36, %s37
    %p48 = scmp.eq.s32.totalorder %s14, 0
    %p49 = por %p47, %p48
    %p50 = scmp.ne.s32.totalorder %s36, %s37
    %p51 = scmp.eq.s32.totalorder %s15, 3
    %p52 = por %p50, %p51
    %p54 = scmp.ne.s32.totalorder %s37, %s53
    %p55 = scmp.eq.s32.totalorder %s15, 0
    %p56 = por %p54, %p55
    %s58 = sadd.s32 %s57, 1
    %p61 = scmp.eq.s32.totalorder %s9, 3
    %p62 = scmp.ne.s32.totalorder %s57, %s59
    %p63 = scmp.eq.s32.totalorder %s9, 0
    %p64 = por %p62, %p63
    %p65 = scmp.ne.s32.totalorder %s57, %s59
    %p66 = scmp.eq.s32.totalorder %s14, 3
    %p67 = por %p65, %p66
    %p68 = scmp.ne.s32.totalorder %s59, %s60
    %p69 = scmp.eq.s32.totalorder %s14, 0
    %p70 = por %p68, %p69
    %p71 = scmp.ne.s32.totalorder %s59, %s60
    %p72 = scmp.eq.s32.totalorder %s15, 3
    %p73 = por %p71, %p72
    %p75 = scmp.ne.s32.totalorder %s60, %s74
    %p76 = scmp.eq.s32.totalorder %s15, 0
    %p77 = por %p75, %p76
    %s79 = sadd.s32 %s78, 1
    %p82 = scmp.eq.s32.totalorder %s9, 3
    %p83 = scmp.ne.s32.totalorder %s78, %s80
    %p84 = scmp.eq.s32.totalorder %s9, 0
    %p85 = por %p83, %p84
    %p86 = scmp.ne.s32.totalorder %s78, %s80
    %p87 = scmp.eq.s32.totalorder %s14, 3
    %p88 = por %p86, %p87
    %p89 = scmp.ne.s32.totalorder %s80, %s81
    %p90 = scmp.eq.s32.totalorder %s14, 0
    %p91 = por %p89, %p90
    %p92 = scmp.ne.s32.totalorder %s80, %s81
    %p93 = scmp.eq.s32.totalorder %s15, 3
    %p94 = por %p92, %p93
    %p96 = scmp.ne.s32.totalorder %s81, %s95
    %p97 = scmp.eq.s32.totalorder %s15, 0
    %p98 = por %p96, %p97
    %s99 = ssub.s32 %s16, %s28
    %s100 = ssub.s32 %s17, %s24
    %s101 = sor.u32 %s99, %s100
    %p102 = scmp.eq.s32.totalorder %s101, 0
    %s104 = sadd.s32 %s103, 1
    %s105 = scalar_select %p102, %s103, %s104
    %p108 = pneg %p102
    %p109 = scmp.eq.s32.totalorder %s9, 3
    %p110 = por %p108, %p109
    %p111 = scmp.ne.s32.totalorder %s103, %s106
    %p112 = scmp.eq.s32.totalorder %s9, 0
    %p113 = por %p111, %p112
    %p114 = scmp.ne.s32.totalorder %s103, %s106
    %p115 = scmp.eq.s32.totalorder %s14, 3
    %p116 = por %p114, %p115
    %p117 = scmp.ne.s32.totalorder %s106, %s107
    %p118 = scmp.eq.s32.totalorder %s14, 0
    %p119 = por %p117, %p118
    %p120 = scmp.ne.s32.totalorder %s106, %s107
    %p121 = scmp.eq.s32.totalorder %s15, 3
    %p122 = por %p120, %p121
    %p124 = scmp.ne.s32.totalorder %s107, %s123
    %p125 = scmp.eq.s32.totalorder %s15, 0
    %p126 = por %p124, %p125
    %p127 = scmp.le.s32.totalorder 1, %s9
    %p128 = scmp.lt.s32.totalorder %s9, 5
    %p129 = pnand %p127, %p128
    %p130 = pneg %p129
    // Predicated region
    $region9: #{gated_residual_block.1} parent=5 // pred_check
      _
    $region10: #{gated_residual_block.1} parent=5 // pred_check_branch
      %132 = sbr.rel (%p129) target = $region12
    $region11: #{gated_residual_block.1} parent=5 // pred_region
      %s133 = ssub.s32 %s9, 1
      // Predicated region
      $region13: #{gated_residual_block.1} parent=11 // pred_check
        %p134 = pneg %p70
      $region14: #{gated_residual_block.1} parent=11 // pred_check_branch
        %136 = sbr.rel (%p134) target = $region16
      $region15: #{gated_residual_block.1} parent=11 // pred_region
        _
      $region16: #{gated_residual_block.1} parent=11 // pred_fallthru
        _
      // Predicated region
      $region17: #{gated_residual_block.1} parent=11 // pred_check
        %p137 = pneg %p91
      $region18: #{gated_residual_block.1} parent=11 // pred_check_branch
        %139 = sbr.rel (%p137) target = $region20
      $region19: #{gated_residual_block.1} parent=11 // pred_region
        _
      $region20: #{gated_residual_block.1} parent=11 // pred_fallthru
        _
    $region12: #{gated_residual_block.1} parent=5 // pred_fallthru
      _
    %p140 = scmp.lt.s32.totalorder %s9, 4
    // Predicated region
    $region21: #{gated_residual_block.1} parent=5 // pred_check
      %p141 = pneg %p140
    $region22: #{gated_residual_block.1} parent=5 // pred_check_branch
      %143 = sbr.rel (%p141) target = $region24
    $region23: #{gated_residual_block.1} parent=5 // pred_region
      // Predicated region
      $region25: #{gated_residual_block.1} parent=23 // pred_check
        %p144 = pneg %p43
      $region26: #{gated_residual_block.1} parent=23 // pred_check_branch
        %146 = sbr.rel (%p144) target = $region28
      $region27: #{gated_residual_block.1} parent=23 // pred_region
        %p147 = scmp.lt.s32.totalorder %s16, 1
        %s148 = scalar_select %p147, %s16, 1
        %p149 = scmp.lt.s32.totalorder %s17, 1
        %s150 = scalar_select %p149, %s17, 1
        %s151 = smul.addr %s150, 30
        %s152 = smul.addr %s148, 60
        %s153 = sadd.s32 %s151, %s152
        %s154 = smul.addr %s153, 8
        %s155 = scalar_lea.vmem %s0, %s154
      $region28: #{gated_residual_block.1} parent=23 // pred_fallthru
        _
    $region24: #{gated_residual_block.1} parent=5 // pred_fallthru
      _
    %p156 = scmp.le.s32.totalorder 1, %s9
    %p157 = scmp.lt.s32.totalorder %s9, 5
    %p158 = pnand %p156, %p157
    %p159 = pneg %p158
    // Predicated region
    $region29: #{gated_residual_block.1} parent=5 // pred_check
      _
    $region30: #{gated_residual_block.1} parent=5 // pred_check_branch
      %161 = sbr.rel (%p158) target = $region32
    $region31: #{gated_residual_block.1} parent=5 // pred_region
      %s162 = ssub.s32 %s9, 1
      %p163 = scmp.lt.s32.totalorder %s18, 1
      %s164 = scalar_select %p163, %s18, 1
      %p165 = scmp.lt.s32.totalorder %s19, 1
      %s166 = scalar_select %p165, %s19, 1
      %s167 = smul.addr %s166, 30
      %s168 = smul.addr %s164, 60
      %s169 = sadd.s32 %s167, %s168
      %s170 = smul.addr %s169, 8
      %s171 = scalar_lea.vmem %s0, %s170
      %p172 = pneg %p49
      %p173 = pneg %p46
      %p174 = pneg %p70
      %p175 = pneg %p67
      %p176 = pneg %p91
      %p177 = pneg %p88
      %p178 = pneg %p119
      %p179 = pneg %p116
      %s180 = smul.u32 8, %s19
      %p181 = scmp.lt.s32.totalorder %s18, 1
      %s182 = scalar_select %p181, %s18, 1
      %p183 = scmp.lt.s32.totalorder %s180, 15
      %s184 = scalar_select %p183, %s180, 15
      %s185 = smul.addr %s184, 2
      %s186 = smul.addr %s182, 32
      %s187 = sadd.s32 %s185, %s186
      %s188 = smul.addr %s187, 8
      %s189 = scalar_lea.vmem %s3, %s188
      %p190 = scmp.lt.s32.totalorder %s18, 1
      %s191 = scalar_select %p190, %s18, 1
      %p192 = scmp.lt.s32.totalorder %s19, 1
      %s193 = scalar_select %p192, %s19, 1
      %s194 = smul.addr %s193, 30
      %s195 = smul.addr %s191, 60
      %s196 = sadd.s32 %s194, %s195
      %s197 = smul.addr %s196, 8
      %s198 = scalar_lea.vmem %s0, %s197
      %s199 = smul.u32 8, %s19
      %p200 = scmp.lt.s32.totalorder %s18, 1
      %s201 = scalar_select %p200, %s18, 1
      %p202 = scmp.lt.s32.totalorder %s199, 15
      %s203 = scalar_select %p202, %s199, 15
      %s204 = smul.addr %s203, 2
      %s205 = smul.addr %s201, 32
      %s206 = sadd.s32 %s204, %s205
      %s207 = smul.addr %s206, 8
      %s208 = scalar_lea.vmem %s3, %s207
      %s209 = smul.u32 8, %s19
      %v210 = vld [vmem:[%s198] sm:$0xff]
      %v211 = vld [vmem:[%s198 + $0x8] sm:$0xff]
      %v212 = vld [vmem:[%s198 + $0x10] sm:$0x3]
      %v213 = vld [vmem:[%s198 + $0x18] sm:$0xff]
      %v214 = vld [vmem:[%s198 + $0x20] sm:$0xff]
      %v215 = vld [vmem:[%s198 + $0x28] sm:$0x3]
      %v216 = vld [vmem:[%s198 + $0x30] sm:$0xff]
      %v217 = vld [vmem:[%s198 + $0x38] sm:$0xff]
      %v218 = vld [vmem:[%s198 + $0x40] sm:$0x3]
      %v219 = vld [vmem:[%s198 + $0x48] sm:$0xff]
      %v220 = vld [vmem:[%s198 + $0x50] sm:$0xff]
      %v221 = vld [vmem:[%s198 + $0x58] sm:$0x3]
      %v222 = vld [vmem:[%s198 + $0x60] sm:$0xff]
      %v223 = vld [vmem:[%s198 + $0x68] sm:$0xff]
      %v224 = vld [vmem:[%s198 + $0x70] sm:$0x3]
      %v225 = vld [vmem:[%s198 + $0x78] sm:$0xff]
      %v226 = vld [vmem:[%s198 + $0x80] sm:$0xff]
      %v227 = vld [vmem:[%s198 + $0x88] sm:$0x3]
      %v228 = vld [vmem:[%s198 + $0x90] sm:$0xff]
      %v229 = vld [vmem:[%s198 + $0x98] sm:$0xff]
      %v230 = vld [vmem:[%s198 + $0xa0] sm:$0x3]
      %v231 = vld [vmem:[%s198 + $0xa8] sm:$0xff]
      %v232 = vld [vmem:[%s198 + $0xb0] sm:$0xff]
      %v233 = vld [vmem:[%s198 + $0xb8] sm:$0x3]
      %v234 = vld [vmem:[%s198 + $0xc0] sm:$0xff]
      %v235 = vld [vmem:[%s198 + $0xc8] sm:$0xff]
      %v236 = vld [vmem:[%s198 + $0xd0] sm:$0x3]
      %v237 = vld [vmem:[%s198 + $0xd8] sm:$0xff]
      %v238 = vld [vmem:[%s198 + $0xe0] sm:$0xff]
      %v239 = vld [vmem:[%s198 + $0xe8] sm:$0x3]
      %vm264 = vcmask 1046528
      %v265 = vrot.slane %v210, 1
      %v266 = vrot.slane %v211, 1
      %v267 = vsel %vm264, %v265, %v266
      %v268 = vrot.slane %v212, 1
      %v269 = vsel %vm264, %v266, %v268
      %v270 = vrot.slane %v213, 1
      %v271 = vrot.slane %v214, 1
      %v272 = vsel %vm264, %v270, %v271
      %v273 = vrot.slane %v215, 1
      %v274 = vsel %vm264, %v271, %v273
      %v275 = vrot.slane %v216, 1
      %v276 = vrot.slane %v217, 1
      %v277 = vsel %vm264, %v275, %v276
      %v278 = vrot.slane %v218, 1
      %v279 = vsel %vm264, %v276, %v278
      %v280 = vrot.slane %v219, 1
      %v281 = vrot.slane %v220, 1
      %v282 = vsel %vm264, %v280, %v281
      %v283 = vrot.slane %v221, 1
      %v284 = vsel %vm264, %v281, %v283
      %v285 = vrot.slane %v222, 1
      %v286 = vrot.slane %v223, 1
      %v287 = vsel %vm264, %v285, %v286
      %v288 = vrot.slane %v224, 1
      %v289 = vsel %vm264, %v286, %v288
      %v290 = vrot.slane %v225, 1
      %v291 = vrot.slane %v226, 1
      %v292 = vsel %vm264, %v290, %v291
      %v293 = vrot.slane %v227, 1
      %v294 = vsel %vm264, %v291, %v293
      %v295 = vrot.slane %v228, 1
      %v296 = vrot.slane %v229, 1
      %v297 = vsel %vm264, %v295, %v296
      %v298 = vrot.slane %v230, 1
      %v299 = vsel %vm264, %v296, %v298
      %v300 = vrot.slane %v231, 1
      %v301 = vrot.slane %v232, 1
      %v302 = vsel %vm264, %v300, %v301
      %v303 = vrot.slane %v233, 1
      %v304 = vsel %vm264, %v301, %v303
      %305 = vrot.lane.b32.xlu0 %v267, 4
      %v306 = vpop.permute.xlu0 %305
      %307 = vrot.lane.b32.xlu0 %v269, 4
      %v308 = vpop.permute.xlu0 %307
      %309 = vrot.lane.b32.xlu0 %v272, 4
      %v310 = vpop.permute.xlu0 %309
      %311 = vrot.lane.b32.xlu0 %v274, 4
      %v312 = vpop.permute.xlu0 %311
      %313 = vrot.lane.b32.xlu0 %v277, 4
      %v314 = vpop.permute.xlu0 %313
      %315 = vrot.lane.b32.xlu0 %v279, 4
      %v316 = vpop.permute.xlu0 %315
      %317 = vrot.lane.b32.xlu0 %v282, 4
      %v318 = vpop.permute.xlu0 %317
      %319 = vrot.lane.b32.xlu0 %v284, 4
      %v320 = vpop.permute.xlu0 %319
      %321 = vrot.lane.b32.xlu0 %v287, 4
      %v322 = vpop.permute.xlu0 %321
      %323 = vrot.lane.b32.xlu0 %v289, 4
      %v324 = vpop.permute.xlu0 %323
      %325 = vrot.lane.b32.xlu0 %v292, 4
      %v326 = vpop.permute.xlu0 %325
      %327 = vrot.lane.b32.xlu0 %v294, 4
      %v328 = vpop.permute.xlu0 %327
      %329 = vrot.lane.b32.xlu0 %v297, 4
      %v330 = vpop.permute.xlu0 %329
      %331 = vrot.lane.b32.xlu0 %v299, 4
      %v332 = vpop.permute.xlu0 %331
      %333 = vrot.lane.b32.xlu0 %v302, 4
      %v334 = vpop.permute.xlu0 %333
      %335 = vrot.lane.b32.xlu0 %v304, 4
      %v336 = vpop.permute.xlu0 %335
      %vm353 = vcmask 1045504
      %v354 = vrot.slane %v210, 2
      %v355 = vrot.slane %v211, 2
      %v356 = vsel %vm353, %v354, %v355
      %v357 = vrot.slane %v212, 2
      %v358 = vsel %vm353, %v355, %v357
      %v359 = vrot.slane %v213, 2
      %v360 = vrot.slane %v214, 2
      %v361 = vsel %vm353, %v359, %v360
      %v362 = vrot.slane %v215, 2
      %v363 = vsel %vm353, %v360, %v362
      %v364 = vrot.slane %v216, 2
      %v365 = vrot.slane %v217, 2
      %v366 = vsel %vm353, %v364, %v365
      %v367 = vrot.slane %v218, 2
      %v368 = vsel %vm353, %v365, %v367
      %v369 = vrot.slane %v219, 2
      %v370 = vrot.slane %v220, 2
      %v371 = vsel %vm353, %v369, %v370
      %v372 = vrot.slane %v221, 2
      %v373 = vsel %vm353, %v370, %v372
      %v374 = vrot.slane %v222, 2
      %v375 = vrot.slane %v223, 2
      %v376 = vsel %vm353, %v374, %v375
      %v377 = vrot.slane %v224, 2
      %v378 = vsel %vm353, %v375, %v377
      %v379 = vrot.slane %v225, 2
      %v380 = vrot.slane %v226, 2
      %v381 = vsel %vm353, %v379, %v380
      %v382 = vrot.slane %v227, 2
      %v383 = vsel %vm353, %v380, %v382
      %v384 = vrot.slane %v228, 2
      %v385 = vrot.slane %v229, 2
      %v386 = vsel %vm353, %v384, %v385
      %v387 = vrot.slane %v230, 2
      %v388 = vsel %vm353, %v385, %v387
      %v389 = vrot.slane %v231, 2
      %v390 = vrot.slane %v232, 2
      %v391 = vsel %vm353, %v389, %v390
      %v392 = vrot.slane %v233, 2
      %v393 = vsel %vm353, %v390, %v392
      %394 = vrot.lane.b32.xlu0 %v356, 8
      %v395 = vpop.permute.xlu0 %394
      %396 = vrot.lane.b32.xlu0 %v358, 8
      %v397 = vpop.permute.xlu0 %396
      %398 = vrot.lane.b32.xlu0 %v361, 8
      %v399 = vpop.permute.xlu0 %398
      %400 = vrot.lane.b32.xlu0 %v363, 8
      %v401 = vpop.permute.xlu0 %400
      %402 = vrot.lane.b32.xlu0 %v366, 8
      %v403 = vpop.permute.xlu0 %402
      %404 = vrot.lane.b32.xlu0 %v368, 8
      %v405 = vpop.permute.xlu0 %404
      %406 = vrot.lane.b32.xlu0 %v371, 8
      %v407 = vpop.permute.xlu0 %406
      %408 = vrot.lane.b32.xlu0 %v373, 8
      %v409 = vpop.permute.xlu0 %408
      %410 = vrot.lane.b32.xlu0 %v376, 8
      %v411 = vpop.permute.xlu0 %410
      %412 = vrot.lane.b32.xlu0 %v378, 8
      %v413 = vpop.permute.xlu0 %412
      %414 = vrot.lane.b32.xlu0 %v381, 8
      %v415 = vpop.permute.xlu0 %414
      %416 = vrot.lane.b32.xlu0 %v383, 8
      %v417 = vpop.permute.xlu0 %416
      %418 = vrot.lane.b32.xlu0 %v386, 8
      %v419 = vpop.permute.xlu0 %418
      %420 = vrot.lane.b32.xlu0 %v388, 8
      %v421 = vpop.permute.xlu0 %420
      %422 = vrot.lane.b32.xlu0 %v391, 8
      %v423 = vpop.permute.xlu0 %422
      %424 = vrot.lane.b32.xlu0 %v393, 8
      %v425 = vpop.permute.xlu0 %424
      %444 = vrot.lane.b32.xlu0 %v213, 12
      %v445 = vpop.permute.xlu0 %444
      %446 = vrot.lane.b32.xlu0 %v214, 12
      %v447 = vpop.permute.xlu0 %446
      %448 = vrot.lane.b32.xlu0 %v216, 12
      %v449 = vpop.permute.xlu0 %448
      %450 = vrot.lane.b32.xlu0 %v217, 12
      %v451 = vpop.permute.xlu0 %450
      %452 = vrot.lane.b32.xlu0 %v219, 12
      %v453 = vpop.permute.xlu0 %452
      %454 = vrot.lane.b32.xlu0 %v220, 12
      %v455 = vpop.permute.xlu0 %454
      %456 = vrot.lane.b32.xlu0 %v222, 12
      %v457 = vpop.permute.xlu0 %456
      %458 = vrot.lane.b32.xlu0 %v223, 12
      %v459 = vpop.permute.xlu0 %458
      %460 = vrot.lane.b32.xlu0 %v225, 12
      %v461 = vpop.permute.xlu0 %460
      %462 = vrot.lane.b32.xlu0 %v226, 12
      %v463 = vpop.permute.xlu0 %462
      %464 = vrot.lane.b32.xlu0 %v228, 12
      %v465 = vpop.permute.xlu0 %464
      %466 = vrot.lane.b32.xlu0 %v229, 12
      %v467 = vpop.permute.xlu0 %466
      %468 = vrot.lane.b32.xlu0 %v231, 12
      %v469 = vpop.permute.xlu0 %468
      %470 = vrot.lane.b32.xlu0 %v232, 12
      %v471 = vpop.permute.xlu0 %470
      %472 = vrot.lane.b32.xlu0 %v234, 12
      %v473 = vpop.permute.xlu0 %472
      %474 = vrot.lane.b32.xlu0 %v235, 12
      %v475 = vpop.permute.xlu0 %474
      %v493 = vrot.slane %v234, 1
      %v494 = vrot.slane %v235, 1
      %v495 = vsel %vm264, %v493, %v494
      %v496 = vrot.slane %v236, 1
      %v497 = vsel %vm264, %v494, %v496
      %498 = vrot.lane.b32.xlu0 %v272, 16
      %v499 = vpop.permute.xlu0 %498
      %500 = vrot.lane.b32.xlu0 %v274, 16
      %v501 = vpop.permute.xlu0 %500
      %502 = vrot.lane.b32.xlu0 %v277, 16
      %v503 = vpop.permute.xlu0 %502
      %504 = vrot.lane.b32.xlu0 %v279, 16
      %v505 = vpop.permute.xlu0 %504
      %506 = vrot.lane.b32.xlu0 %v282, 16
      %v507 = vpop.permute.xlu0 %506
      %508 = vrot.lane.b32.xlu0 %v284, 16
      %v509 = vpop.permute.xlu0 %508
      %510 = vrot.lane.b32.xlu0 %v287, 16
      %v511 = vpop.permute.xlu0 %510
      %512 = vrot.lane.b32.xlu0 %v289, 16
      %v513 = vpop.permute.xlu0 %512
      %514 = vrot.lane.b32.xlu0 %v292, 16
      %v515 = vpop.permute.xlu0 %514
      %516 = vrot.lane.b32.xlu0 %v294, 16
      %v517 = vpop.permute.xlu0 %516
      %518 = vrot.lane.b32.xlu0 %v297, 16
      %v519 = vpop.permute.xlu0 %518
      %520 = vrot.lane.b32.xlu0 %v299, 16
      %v521 = vpop.permute.xlu0 %520
      %522 = vrot.lane.b32.xlu0 %v302, 16
      %v523 = vpop.permute.xlu0 %522
      %524 = vrot.lane.b32.xlu0 %v304, 16
      %v525 = vpop.permute.xlu0 %524
      %526 = vrot.lane.b32.xlu0 %v495, 16
      %v527 = vpop.permute.xlu0 %526
      %528 = vrot.lane.b32.xlu0 %v497, 16
      %v529 = vpop.permute.xlu0 %528
      %v546 = vrot.slane %v234, 2
      %v547 = vrot.slane %v235, 2
      %v548 = vsel %vm353, %v546, %v547
      %v549 = vrot.slane %v236, 2
      %v550 = vsel %vm353, %v547, %v549
      %551 = vrot.lane.b32.xlu0 %v361, 20
      %v552 = vpop.permute.xlu0 %551
      %553 = vrot.lane.b32.xlu0 %v363, 20
      %v554 = vpop.permute.xlu0 %553
      %555 = vrot.lane.b32.xlu0 %v366, 20
      %v556 = vpop.permute.xlu0 %555
      %557 = vrot.lane.b32.xlu0 %v368, 20
      %v558 = vpop.permute.xlu0 %557
      %559 = vrot.lane.b32.xlu0 %v371, 20
      %v560 = vpop.permute.xlu0 %559
      %561 = vrot.lane.b32.xlu0 %v373, 20
      %v562 = vpop.permute.xlu0 %561
      %563 = vrot.lane.b32.xlu0 %v376, 20
      %v564 = vpop.permute.xlu0 %563
      %565 = vrot.lane.b32.xlu0 %v378, 20
      %v566 = vpop.permute.xlu0 %565
      %567 = vrot.lane.b32.xlu0 %v381, 20
      %v568 = vpop.permute.xlu0 %567
      %569 = vrot.lane.b32.xlu0 %v383, 20
      %v570 = vpop.permute.xlu0 %569
      %571 = vrot.lane.b32.xlu0 %v386, 20
      %v572 = vpop.permute.xlu0 %571
      %573 = vrot.lane.b32.xlu0 %v388, 20
      %v574 = vpop.permute.xlu0 %573
      %575 = vrot.lane.b32.xlu0 %v391, 20
      %v576 = vpop.permute.xlu0 %575
      %577 = vrot.lane.b32.xlu0 %v393, 20
      %v578 = vpop.permute.xlu0 %577
      %579 = vrot.lane.b32.xlu0 %v548, 20
      %v580 = vpop.permute.xlu0 %579
      %581 = vrot.lane.b32.xlu0 %v550, 20
      %v582 = vpop.permute.xlu0 %581
      %601 = vrot.lane.b32.xlu0 %v216, 24
      %v602 = vpop.permute.xlu0 %601
      %603 = vrot.lane.b32.xlu0 %v217, 24
      %v604 = vpop.permute.xlu0 %603
      %605 = vrot.lane.b32.xlu0 %v219, 24
      %v606 = vpop.permute.xlu0 %605
      %607 = vrot.lane.b32.xlu0 %v220, 24
      %v608 = vpop.permute.xlu0 %607
      %609 = vrot.lane.b32.xlu0 %v222, 24
      %v610 = vpop.permute.xlu0 %609
      %611 = vrot.lane.b32.xlu0 %v223, 24
      %v612 = vpop.permute.xlu0 %611
      %613 = vrot.lane.b32.xlu0 %v225, 24
      %v614 = vpop.permute.xlu0 %613
      %615 = vrot.lane.b32.xlu0 %v226, 24
      %v616 = vpop.permute.xlu0 %615
      %617 = vrot.lane.b32.xlu0 %v228, 24
      %v618 = vpop.permute.xlu0 %617
      %619 = vrot.lane.b32.xlu0 %v229, 24
      %v620 = vpop.permute.xlu0 %619
      %621 = vrot.lane.b32.xlu0 %v231, 24
      %v622 = vpop.permute.xlu0 %621
      %623 = vrot.lane.b32.xlu0 %v232, 24
      %v624 = vpop.permute.xlu0 %623
      %625 = vrot.lane.b32.xlu0 %v234, 24
      %v626 = vpop.permute.xlu0 %625
      %627 = vrot.lane.b32.xlu0 %v235, 24
      %v628 = vpop.permute.xlu0 %627
      %629 = vrot.lane.b32.xlu0 %v237, 24
      %v630 = vpop.permute.xlu0 %629
      %631 = vrot.lane.b32.xlu0 %v238, 24
      %v632 = vpop.permute.xlu0 %631
      %v650 = vrot.slane %v237, 1
      %v651 = vrot.slane %v238, 1
      %v652 = vsel %vm264, %v650, %v651
      %v653 = vrot.slane %v239, 1
      %v654 = vsel %vm264, %v651, %v653
      %655 = vrot.lane.b32.xlu0 %v277, 28
      %v656 = vpop.permute.xlu0 %655
      %657 = vrot.lane.b32.xlu0 %v279, 28
      %v658 = vpop.permute.xlu0 %657
      %659 = vrot.lane.b32.xlu0 %v282, 28
      %v660 = vpop.permute.xlu0 %659
      %661 = vrot.lane.b32.xlu0 %v284, 28
      %v662 = vpop.permute.xlu0 %661
      %663 = vrot.lane.b32.xlu0 %v287, 28
      %v664 = vpop.permute.xlu0 %663
      %665 = vrot.lane.b32.xlu0 %v289, 28
      %v666 = vpop.permute.xlu0 %665
      %667 = vrot.lane.b32.xlu0 %v292, 28
      %v668 = vpop.permute.xlu0 %667
      %669 = vrot.lane.b32.xlu0 %v294, 28
      %v670 = vpop.permute.xlu0 %669
      %671 = vrot.lane.b32.xlu0 %v297, 28
      %v672 = vpop.permute.xlu0 %671
      %673 = vrot.lane.b32.xlu0 %v299, 28
      %v674 = vpop.permute.xlu0 %673
      %675 = vrot.lane.b32.xlu0 %v302, 28
      %v676 = vpop.permute.xlu0 %675
      %677 = vrot.lane.b32.xlu0 %v304, 28
      %v678 = vpop.permute.xlu0 %677
      %679 = vrot.lane.b32.xlu0 %v495, 28
      %v680 = vpop.permute.xlu0 %679
      %681 = vrot.lane.b32.xlu0 %v497, 28
      %v682 = vpop.permute.xlu0 %681
      %683 = vrot.lane.b32.xlu0 %v652, 28
      %v684 = vpop.permute.xlu0 %683
      %685 = vrot.lane.b32.xlu0 %v654, 28
      %v686 = vpop.permute.xlu0 %685
      %v703 = vrot.slane %v237, 2
      %v704 = vrot.slane %v238, 2
      %v705 = vsel %vm353, %v703, %v704
      %v706 = vrot.slane %v239, 2
      %v707 = vsel %vm353, %v704, %v706
      %708 = vrot.lane.b32.xlu0 %v366, 32
      %v709 = vpop.permute.xlu0 %708
      %710 = vrot.lane.b32.xlu0 %v368, 32
      %v711 = vpop.permute.xlu0 %710
      %712 = vrot.lane.b32.xlu0 %v371, 32
      %v713 = vpop.permute.xlu0 %712
      %714 = vrot.lane.b32.xlu0 %v373, 32
      %v715 = vpop.permute.xlu0 %714
      %716 = vrot.lane.b32.xlu0 %v376, 32
      %v717 = vpop.permute.xlu0 %716
      %718 = vrot.lane.b32.xlu0 %v378, 32
      %v719 = vpop.permute.xlu0 %718
      %720 = vrot.lane.b32.xlu0 %v381, 32
      %v721 = vpop.permute.xlu0 %720
      %722 = vrot.lane.b32.xlu0 %v383, 32
      %v723 = vpop.permute.xlu0 %722
      %724 = vrot.lane.b32.xlu0 %v386, 32
      %v725 = vpop.permute.xlu0 %724
      %726 = vrot.lane.b32.xlu0 %v388, 32
      %v727 = vpop.permute.xlu0 %726
      %728 = vrot.lane.b32.xlu0 %v391, 32
      %v729 = vpop.permute.xlu0 %728
      %730 = vrot.lane.b32.xlu0 %v393, 32
      %v731 = vpop.permute.xlu0 %730
      %732 = vrot.lane.b32.xlu0 %v548, 32
      %v733 = vpop.permute.xlu0 %732
      %734 = vrot.lane.b32.xlu0 %v550, 32
      %v735 = vpop.permute.xlu0 %734
      %736 = vrot.lane.b32.xlu0 %v705, 32
      %v737 = vpop.permute.xlu0 %736
      %738 = vrot.lane.b32.xlu0 %v707, 32
      %v739 = vpop.permute.xlu0 %738
      %vm756 = vcmask 31744
      %v757 = vsel %vm756, %v210, %v306
      %v758 = vsel %vm756, %v211, %v308
      %v759 = vsel %vm756, %v213, %v310
      %v760 = vsel %vm756, %v214, %v312
      %v761 = vsel %vm756, %v216, %v314
      %v762 = vsel %vm756, %v217, %v316
      %v763 = vsel %vm756, %v219, %v318
      %v764 = vsel %vm756, %v220, %v320
      %v765 = vsel %vm756, %v222, %v322
      %v766 = vsel %vm756, %v223, %v324
      %v767 = vsel %vm756, %v225, %v326
      %v768 = vsel %vm756, %v226, %v328
      %v769 = vsel %vm756, %v228, %v330
      %v770 = vsel %vm756, %v229, %v332
      %v771 = vsel %vm756, %v231, %v334
      %v772 = vsel %vm756, %v232, %v336
      %vm773 = vcmask 64512
      %v774 = vsel %vm773, %v757, %v395
      %v775 = vsel %vm773, %v758, %v397
      %v776 = vsel %vm773, %v759, %v399
      %v777 = vsel %vm773, %v760, %v401
      %v778 = vsel %vm773, %v761, %v403
      %v779 = vsel %vm773, %v762, %v405
      %v780 = vsel %vm773, %v763, %v407
      %v781 = vsel %vm773, %v764, %v409
      %v782 = vsel %vm773, %v765, %v411
      %v783 = vsel %vm773, %v766, %v413
      %v784 = vsel %vm773, %v767, %v415
      %v785 = vsel %vm773, %v768, %v417
      %v786 = vsel %vm773, %v769, %v419
      %v787 = vsel %vm773, %v770, %v421
      %v788 = vsel %vm773, %v771, %v423
      %v789 = vsel %vm773, %v772, %v425
      %vm790 = vcmask 97280
      %v791 = vsel %vm790, %v774, %v445
      %v792 = vsel %vm790, %v775, %v447
      %v793 = vsel %vm790, %v776, %v449
      %v794 = vsel %vm790, %v777, %v451
      %v795 = vsel %vm790, %v778, %v453
      %v796 = vsel %vm790, %v779, %v455
      %v797 = vsel %vm790, %v780, %v457
      %v798 = vsel %vm790, %v781, %v459
      %v799 = vsel %vm790, %v782, %v461
      %v800 = vsel %vm790, %v783, %v463
      %v801 = vsel %vm790, %v784, %v465
      %v802 = vsel %vm790, %v785, %v467
      %v803 = vsel %vm790, %v786, %v469
      %v804 = vsel %vm790, %v787, %v471
      %v805 = vsel %vm790, %v788, %v473
      %v806 = vsel %vm790, %v789, %v475
      %vm807 = vcmask 130048
      %v808 = vsel %vm807, %v791, %v499
      %v809 = vsel %vm807, %v792, %v501
      %v810 = vsel %vm807, %v793, %v503
      %v811 = vsel %vm807, %v794, %v505
      %v812 = vsel %vm807, %v795, %v507
      %v813 = vsel %vm807, %v796, %v509
      %v814 = vsel %vm807, %v797, %v511
      %v815 = vsel %vm807, %v798, %v513
      %v816 = vsel %vm807, %v799, %v515
      %v817 = vsel %vm807, %v800, %v517
      %v818 = vsel %vm807, %v801, %v519
      %v819 = vsel %vm807, %v802, %v521
      %v820 = vsel %vm807, %v803, %v523
      %v821 = vsel %vm807, %v804, %v525
      %v822 = vsel %vm807, %v805, %v527
      %v823 = vsel %vm807, %v806, %v529
      %vm824 = vcmask 162816
      %v825 = vsel %vm824, %v808, %v552
      %v826 = vsel %vm824, %v809, %v554
      %v827 = vsel %vm824, %v810, %v556
      %v828 = vsel %vm824, %v811, %v558
      %v829 = vsel %vm824, %v812, %v560
      %v830 = vsel %vm824, %v813, %v562
      %v831 = vsel %vm824, %v814, %v564
      %v832 = vsel %vm824, %v815, %v566
      %v833 = vsel %vm824, %v816, %v568
      %v834 = vsel %vm824, %v817, %v570
      %v835 = vsel %vm824, %v818, %v572
      %v836 = vsel %vm824, %v819, %v574
      %v837 = vsel %vm824, %v820, %v576
      %v838 = vsel %vm824, %v821, %v578
      %v839 = vsel %vm824, %v822, %v580
      %v840 = vsel %vm824, %v823, %v582
      %vm841 = vcmask 195584
      %v842 = vsel %vm841, %v825, %v602
      %v843 = vsel %vm841, %v826, %v604
      %v844 = vsel %vm841, %v827, %v606
      %v845 = vsel %vm841, %v828, %v608
      %v846 = vsel %vm841, %v829, %v610
      %v847 = vsel %vm841, %v830, %v612
      %v848 = vsel %vm841, %v831, %v614
      %v849 = vsel %vm841, %v832, %v616
      %v850 = vsel %vm841, %v833, %v618
      %v851 = vsel %vm841, %v834, %v620
      %v852 = vsel %vm841, %v835, %v622
      %v853 = vsel %vm841, %v836, %v624
      %v854 = vsel %vm841, %v837, %v626
      %v855 = vsel %vm841, %v838, %v628
      %v856 = vsel %vm841, %v839, %v630
      %v857 = vsel %vm841, %v840, %v632
      %vm858 = vcmask 228352
      %v859 = vsel %vm858, %v842, %v656
      %v860 = vsel %vm858, %v843, %v658
      %v861 = vsel %vm858, %v844, %v660
      %v862 = vsel %vm858, %v845, %v662
      %v863 = vsel %vm858, %v846, %v664
      %v864 = vsel %vm858, %v847, %v666
      %v865 = vsel %vm858, %v848, %v668
      %v866 = vsel %vm858, %v849, %v670
      %v867 = vsel %vm858, %v850, %v672
      %v868 = vsel %vm858, %v851, %v674
      %v869 = vsel %vm858, %v852, %v676
      %v870 = vsel %vm858, %v853, %v678
      %v871 = vsel %vm858, %v854, %v680
      %v872 = vsel %vm858, %v855, %v682
      %v873 = vsel %vm858, %v856, %v684
      %v874 = vsel %vm858, %v857, %v686
      %vm875 = vcmask 261120
      %v876 = vsel %vm875, %v859, %v709
      %v877 = vsel %vm875, %v860, %v711
      %v878 = vsel %vm875, %v861, %v713
      %v879 = vsel %vm875, %v862, %v715
      %v880 = vsel %vm875, %v863, %v717
      %v881 = vsel %vm875, %v864, %v719
      %v882 = vsel %vm875, %v865, %v721
      %v883 = vsel %vm875, %v866, %v723
      %v884 = vsel %vm875, %v867, %v725
      %v885 = vsel %vm875, %v868, %v727
      %v886 = vsel %vm875, %v869, %v729
      %v887 = vsel %vm875, %v870, %v731
      %v888 = vsel %vm875, %v871, %v733
      %v889 = vsel %vm875, %v872, %v735
      %v890 = vsel %vm875, %v873, %v737
      %v891 = vsel %vm875, %v874, %v739
      %v892 = vld [vmem:[%s1] sm:$0xff]
      %v893 = vld [vmem:[%s1 + $0x8] sm:$0xff]
      %v894 = vld [vmem:[%s1 + $0x10] sm:$0xff]
      %v895 = vld [vmem:[%s1 + $0x18] sm:$0xff]
      %v896 = vld [vmem:[%s1 + $0x20] sm:$0xf]
      %v897 = vld [vmem:[%s2] sm:$0x1]
      %v899 = vlaneseq
      %v900 = vshrl.u32 %v899, 7
      %v901 = vsub.s32 0, %v900
      %v902 = vrot.slane %v897, %v901
      %vm904 = vcmask 293888
      %v906 = vsel %vm904, %v876, 0
      %v909 = vsel %vm904, %v877, 0
      %v912 = vsel %vm904, %v878, 0
      %v915 = vsel %vm904, %v879, 0
      %v918 = vsel %vm904, %v880, 0
      %v921 = vsel %vm904, %v881, 0
      %v924 = vsel %vm904, %v882, 0
      %v927 = vsel %vm904, %v883, 0
      %v930 = vsel %vm904, %v884, 0
      %v933 = vsel %vm904, %v885, 0
      %v936 = vsel %vm904, %v886, 0
      %v939 = vsel %vm904, %v887, 0
      %v942 = vsel %vm904, %v888, 0
      %v945 = vsel %vm904, %v889, 0
      %v948 = vsel %vm904, %v890, 0
      %v951 = vsel %vm904, %v891, 0
      %vm953 = vcmask 1043456
      %v955 = vsel %vm953, %v896, 0
      %957 = vmatprep.subr.mxu0 0.0
      %958 = vmatpush1.msra.mxu0 %v892
      %959 = vmatprep.subr.mxu0 0.0
      %960 = vmatpush1.msra.mxu0 %v893
      %961 = vmatprep.subr.mxu0 0.0
      %962 = vmatpush1.msra.mxu0 %v894
      %963 = vmatprep.subr.mxu0 0.0
      %964 = vmatpush1.msra.mxu0 %v895
      %965 = vmatprep.subr.mxu0 0.0
      %966 = vmatpush1.msra.mxu0 %v955
      %967 = vmatprep.subr.mxu0 0.0
      %968 = vmatpush1.msra.mxu0 0.0
      %969 = vmatprep.subr.mxu0 0.0
      %970 = vmatpush1.msra.mxu0 0.0
      %971 = vmatprep.subr.mxu0 0.0
      %972 = vmatpush1.msra.mxu0 0.0
      %973 = vmatprep.subr.mxu0 0.0
      %974 = vmatpush1.msra.mxu0 0.0
      %975 = vmatprep.subr.mxu0 0.0
      %976 = vmatpush1.msra.mxu0 0.0
      %977 = vmatprep.subr.mxu0 0.0
      %978 = vmatpush1.msra.mxu0 0.0
      %979 = vmatprep.subr.mxu0 0.0
      %980 = vmatpush1.msra.mxu0 0.0
      %981 = vmatprep.subr.mxu0 0.0
      %982 = vmatpush1.msra.mxu0 0.0
      %983 = vmatprep.subr.mxu0 0.0
      %984 = vmatpush1.msra.mxu0 0.0
      %985 = vmatprep.subr.mxu0 0.0
      %986 = vmatpush1.msra.mxu0 0.0
      %987 = vmatprep.subr.mxu0 0.0
      %988 = vmatpush1.msra.mxu0 0.0
      %989 = vmatprep.subr.mxu0 0.0
      %990 = vmatpush1.msra.mxu0 0.0
      %991 = vmatprep.subr.mxu0 0.0
      %992 = vmatpush1.msra.mxu0 0.0
      %993 = vmatprep.subr.mxu0 0.0
      %994 = vmatpush1.msra.mxu0 0.0
      %995 = vmatprep.subr.mxu0 0.0
      %996 = vmatpush1.msra.mxu0 0.0
      %997 = vmatprep.subr.mxu0 0.0
      %998 = vmatpush1.msra.mxu0 0.0
      %999 = vmatprep.subr.mxu0 0.0
      %1000 = vmatpush1.msra.mxu0 0.0
      %1001 = vmatprep.subr.mxu0 0.0
      %1002 = vmatpush1.msra.mxu0 0.0
      %1003 = vmatprep.subr.mxu0 0.0
      %1004 = vmatpush1.msra.mxu0 0.0
      %1005 = vmatprep.subr.mxu0 0.0
      %1006 = vmatpush1.msra.mxu0 0.0
      %1007 = vmatprep.subr.mxu0 0.0
      %1008 = vmatpush1.msra.mxu0 0.0
      %1009 = vmatprep.subr.mxu0 0.0
      %1010 = vmatpush1.msra.mxu0 0.0
      %1011 = vmatprep.subr.mxu0 0.0
      %1012 = vmatpush1.msra.mxu0 0.0
      %1013 = vmatprep.subr.mxu0 0.0
      %1014 = vmatpush1.msra.mxu0 0.0
      %1015 = vmatprep.subr.mxu0 0.0
      %1016 = vmatpush1.msra.mxu0 0.0
      %1017 = vmatprep.subr.mxu0 0.0
      %1018 = vmatpush1.msra.mxu0 0.0
      %1019 = vmatprep.subr.mxu0 0.0
      %1020 = vmatpush1.msra.mxu0 0.0
      %1021 = vmatprep.mubr.f32.mxu0 0.0
      %1022 = vmatmul.mubr.f32.gmra.mrb[0].mxu0 %v906
      %v1023 = vpop.f32.mrb[0].mxu0
      %v1024 = vadd.f32 %v902, %v1023
      %v1025 = vpop.f32.mrb[0].mxu0
      %1026 = vmatprep.mubr.f32.mxu0 0.0
      %1027 = vmatmul.mubr.f32.gmra.mrb[0].mxu0 %v909
      %v1028 = vpop.f32.mrb[0].mxu0
      %v1029 = vadd.f32 %v902, %v1028
      %v1030 = vpop.f32.mrb[0].mxu0
      %1031 = vmatprep.mubr.f32.mxu0 0.0
      %1032 = vmatmul.mubr.f32.gmra.mrb[0].mxu0 %v912
      %v1033 = vpop.f32.mrb[0].mxu0
      %v1034 = vadd.f32 %v902, %v1033
      %v1035 = vpop.f32.mrb[0].mxu0
      %1036 = vmatprep.mubr.f32.mxu0 0.0
      %1037 = vmatmul.mubr.f32.gmra.mrb[0].mxu0 %v915
      %v1038 = vpop.f32.mrb[0].mxu0
      %v1039 = vadd.f32 %v902, %v1038
      %v1040 = vpop.f32.mrb[0].mxu0
      %1041 = vmatprep.mubr.f32.mxu0 0.0
      %1042 = vmatmul.mubr.f32.gmra.mrb[0].mxu0 %v918
      %v1043 = vpop.f32.mrb[0].mxu0
      %v1044 = vadd.f32 %v902, %v1043
      %v1045 = vpop.f32.mrb[0].mxu0
      %1046 = vmatprep.mubr.f32.mxu0 0.0
      %1047 = vmatmul.mubr.f32.gmra.mrb[0].mxu0 %v921
      %v1048 = vpop.f32.mrb[0].mxu0
      %v1049 = vadd.f32 %v902, %v1048
      %v1050 = vpop.f32.mrb[0].mxu0
      %1051 = vmatprep.mubr.f32.mxu0 0.0
      %1052 = vmatmul.mubr.f32.gmra.mrb[0].mxu0 %v924
      %v1053 = vpop.f32.mrb[0].mxu0
      %v1054 = vadd.f32 %v902, %v1053
      %v1055 = vpop.f32.mrb[0].mxu0
      %1056 = vmatprep.mubr.f32.mxu0 0.0
      %1057 = vmatmul.mubr.f32.gmra.mrb[0].mxu0 %v927
      %v1058 = vpop.f32.mrb[0].mxu0
      %v1059 = vadd.f32 %v902, %v1058
      %v1060 = vpop.f32.mrb[0].mxu0
      %1061 = vmatprep.mubr.f32.mxu0 0.0
      %1062 = vmatmul.mubr.f32.gmra.mrb[0].mxu0 %v930
      %v1063 = vpop.f32.mrb[0].mxu0
      %v1064 = vadd.f32 %v902, %v1063
      %v1065 = vpop.f32.mrb[0].mxu0
      %1066 = vmatprep.mubr.f32.mxu0 0.0
      %1067 = vmatmul.mubr.f32.gmra.mrb[0].mxu0 %v933
      %v1068 = vpop.f32.mrb[0].mxu0
      %v1069 = vadd.f32 %v902, %v1068
      %v1070 = vpop.f32.mrb[0].mxu0
      %1071 = vmatprep.mubr.f32.mxu0 0.0
      %1072 = vmatmul.mubr.f32.gmra.mrb[0].mxu0 %v936
      %v1073 = vpop.f32.mrb[0].mxu0
      %v1074 = vadd.f32 %v902, %v1073
      %v1075 = vpop.f32.mrb[0].mxu0
      %1076 = vmatprep.mubr.f32.mxu0 0.0
      %1077 = vmatmul.mubr.f32.gmra.mrb[0].mxu0 %v939
      %v1078 = vpop.f32.mrb[0].mxu0
      %v1079 = vadd.f32 %v902, %v1078
      %v1080 = vpop.f32.mrb[0].mxu0
      %1081 = vmatprep.mubr.f32.mxu0 0.0
      %1082 = vmatmul.mubr.f32.gmra.mrb[0].mxu0 %v942
      %v1083 = vpop.f32.mrb[0].mxu0
      %v1084 = vadd.f32 %v902, %v1083
      %v1085 = vpop.f32.mrb[0].mxu0
      %1086 = vmatprep.mubr.f32.mxu0 0.0
      %1087 = vmatmul.mubr.f32.gmra.mrb[0].mxu0 %v945
      %v1088 = vpop.f32.mrb[0].mxu0
      %v1089 = vadd.f32 %v902, %v1088
      %v1090 = vpop.f32.mrb[0].mxu0
      %1091 = vmatprep.mubr.f32.mxu0 0.0
      %1092 = vmatmul.mubr.f32.gmra.mrb[0].mxu0 %v948
      %v1093 = vpop.f32.mrb[0].mxu0
      %v1094 = vadd.f32 %v902, %v1093
      %v1095 = vpop.f32.mrb[0].mxu0
      %1096 = vmatprep.mubr.f32.mxu0 0.0
      %1097 = vmatmul.mubr.f32.gmra.mrb[0].mxu0 %v951
      %v1098 = vpop.f32.mrb[0].mxu0
      %v1099 = vadd.f32 %v902, %v1098
      %v1100 = vpop.f32.mrb[0].mxu0
      %1101 = vdwg.mxu0
      %v1102 = vxor.u32 %v1024, 2147483648
      %v1103 = vxor.u32 %v1029, 2147483648
      %v1104 = vxor.u32 %v1034, 2147483648
      %v1105 = vxor.u32 %v1039, 2147483648
      %v1106 = vxor.u32 %v1044, 2147483648
      %v1107 = vxor.u32 %v1049, 2147483648
      %v1108 = vxor.u32 %v1054, 2147483648
      %v1109 = vxor.u32 %v1059, 2147483648
      %v1110 = vxor.u32 %v1064, 2147483648
      %v1111 = vxor.u32 %v1069, 2147483648
      %v1112 = vxor.u32 %v1074, 2147483648
      %v1113 = vxor.u32 %v1079, 2147483648
      %v1114 = vxor.u32 %v1084, 2147483648
      %v1115 = vxor.u32 %v1089, 2147483648
      %v1116 = vxor.u32 %v1094, 2147483648
      %v1117 = vxor.u32 %v1099, 2147483648
      %v1118 = vmul.f32 %v1102, 1.442695
      %v1119 = vpow.pop %v1118
      %v1120 = vmul.f32 %v1103, 1.442695
      %v1121 = vpow.pop %v1120
      %v1122 = vmul.f32 %v1104, 1.442695
      %v1123 = vpow.pop %v1122
      %v1124 = vmul.f32 %v1105, 1.442695
      %v1125 = vpow.pop %v1124
      %v1126 = vmul.f32 %v1106, 1.442695
      %v1127 = vpow.pop %v1126
      %v1128 = vmul.f32 %v1107, 1.442695
      %v1129 = vpow.pop %v1128
      %v1130 = vmul.f32 %v1108, 1.442695
      %v1131 = vpow.pop %v1130
      %v1132 = vmul.f32 %v1109, 1.442695
      %v1133 = vpow.pop %v1132
      %v1134 = vmul.f32 %v1110, 1.442695
      %v1135 = vpow.pop %v1134
      %v1136 = vmul.f32 %v1111, 1.442695
      %v1137 = vpow.pop %v1136
      %v1138 = vmul.f32 %v1112, 1.442695
      %v1139 = vpow.pop %v1138
      %v1140 = vmul.f32 %v1113, 1.442695
      %v1141 = vpow.pop %v1140
      %v1142 = vmul.f32 %v1114, 1.442695
      %v1143 = vpow.pop %v1142
      %v1144 = vmul.f32 %v1115, 1.442695
      %v1145 = vpow.pop %v1144
      %v1146 = vmul.f32 %v1116, 1.442695
      %v1147 = vpow.pop %v1146
      %v1148 = vmul.f32 %v1117, 1.442695
      %v1149 = vpow.pop %v1148
      %v1150 = vadd.f32 %v1119, 1.0
      %v1151 = vadd.f32 %v1121, 1.0
      %v1152 = vadd.f32 %v1123, 1.0
      %v1153 = vadd.f32 %v1125, 1.0
      %v1154 = vadd.f32 %v1127, 1.0
      %v1155 = vadd.f32 %v1129, 1.0
      %v1156 = vadd.f32 %v1131, 1.0
      %v1157 = vadd.f32 %v1133, 1.0
      %v1158 = vadd.f32 %v1135, 1.0
      %v1159 = vadd.f32 %v1137, 1.0
      %v1160 = vadd.f32 %v1139, 1.0
      %v1161 = vadd.f32 %v1141, 1.0
      %v1162 = vadd.f32 %v1143, 1.0
      %v1163 = vadd.f32 %v1145, 1.0
      %v1164 = vadd.f32 %v1147, 1.0
      %v1165 = vadd.f32 %v1149, 1.0
      %v1166 = vrcp.pop %v1150
      %v1167 = vmul.f32 1.0, %v1166
      %v1168 = vrcp.pop %v1151
      %v1169 = vmul.f32 1.0, %v1168
      %v1170 = vrcp.pop %v1152
      %v1171 = vmul.f32 1.0, %v1170
      %v1172 = vrcp.pop %v1153
      %v1173 = vmul.f32 1.0, %v1172
      %v1174 = vrcp.pop %v1154
      %v1175 = vmul.f32 1.0, %v1174
      %v1176 = vrcp.pop %v1155
      %v1177 = vmul.f32 1.0, %v1176
      %v1178 = vrcp.pop %v1156
      %v1179 = vmul.f32 1.0, %v1178
      %v1180 = vrcp.pop %v1157
      %v1181 = vmul.f32 1.0, %v1180
      %v1182 = vrcp.pop %v1158
      %v1183 = vmul.f32 1.0, %v1182
      %v1184 = vrcp.pop %v1159
      %v1185 = vmul.f32 1.0, %v1184
      %v1186 = vrcp.pop %v1160
      %v1187 = vmul.f32 1.0, %v1186
      %v1188 = vrcp.pop %v1161
      %v1189 = vmul.f32 1.0, %v1188
      %v1190 = vrcp.pop %v1162
      %v1191 = vmul.f32 1.0, %v1190
      %v1192 = vrcp.pop %v1163
      %v1193 = vmul.f32 1.0, %v1192
      %v1194 = vrcp.pop %v1164
      %v1195 = vmul.f32 1.0, %v1194
      %v1196 = vrcp.pop %v1165
      %v1197 = vmul.f32 1.0, %v1196
      %1214 = vrot.lane.b32.xlu0 %v1167, 124
      %v1215 = vpop.permute.xlu0 %1214
      %1216 = vrot.lane.b32.xlu0 %v1169, 124
      %v1217 = vpop.permute.xlu0 %1216
      %1218 = vrot.lane.b32.xlu0 %v1171, 124
      %v1219 = vpop.permute.xlu0 %1218
      %1220 = vrot.lane.b32.xlu0 %v1173, 124
      %v1221 = vpop.permute.xlu0 %1220
      %1222 = vrot.lane.b32.xlu0 %v1175, 124
      %v1223 = vpop.permute.xlu0 %1222
      %1224 = vrot.lane.b32.xlu0 %v1177, 124
      %v1225 = vpop.permute.xlu0 %1224
      %1226 = vrot.lane.b32.xlu0 %v1179, 124
      %v1227 = vpop.permute.xlu0 %1226
      %1228 = vrot.lane.b32.xlu0 %v1181, 124
      %v1229 = vpop.permute.xlu0 %1228
      %1230 = vrot.lane.b32.xlu0 %v1183, 124
      %v1231 = vpop.permute.xlu0 %1230
      %1232 = vrot.lane.b32.xlu0 %v1185, 124
      %v1233 = vpop.permute.xlu0 %1232
      %1234 = vrot.lane.b32.xlu0 %v1187, 124
      %v1235 = vpop.permute.xlu0 %1234
      %1236 = vrot.lane.b32.xlu0 %v1189, 124
      %v1237 = vpop.permute.xlu0 %1236
      %1238 = vrot.lane.b32.xlu0 %v1191, 124
      %v1239 = vpop.permute.xlu0 %1238
      %1240 = vrot.lane.b32.xlu0 %v1193, 124
      %v1241 = vpop.permute.xlu0 %1240
      %1242 = vrot.lane.b32.xlu0 %v1195, 124
      %v1243 = vpop.permute.xlu0 %1242
      %1244 = vrot.lane.b32.xlu0 %v1197, 124
      %v1245 = vpop.permute.xlu0 %1244
      %v1262 = vmul.f32 %v1024, %v1215
      %v1263 = vmul.f32 %v1029, %v1217
      %v1264 = vmul.f32 %v1034, %v1219
      %v1265 = vmul.f32 %v1039, %v1221
      %v1266 = vmul.f32 %v1044, %v1223
      %v1267 = vmul.f32 %v1049, %v1225
      %v1268 = vmul.f32 %v1054, %v1227
      %v1269 = vmul.f32 %v1059, %v1229
      %v1270 = vmul.f32 %v1064, %v1231
      %v1271 = vmul.f32 %v1069, %v1233
      %v1272 = vmul.f32 %v1074, %v1235
      %v1273 = vmul.f32 %v1079, %v1237
      %v1274 = vmul.f32 %v1084, %v1239
      %v1275 = vmul.f32 %v1089, %v1241
      %v1276 = vmul.f32 %v1094, %v1243
      %v1277 = vmul.f32 %v1099, %v1245
      %1278 = vst.msk [vmem:[%s208] sm:$0xff] %vm756, %v1262
      %1279 = vst.msk [vmem:[%s208 + $0x8] sm:$0xff] %vm756, %v1263
      %1280 = vst.msk [vmem:[%s208 + $0x10] sm:$0xff] %vm756, %v1264
      %1281 = vst.msk [vmem:[%s208 + $0x18] sm:$0xff] %vm756, %v1265
      %1282 = vst.msk [vmem:[%s208 + $0x20] sm:$0xff] %vm756, %v1266
      %1283 = vst.msk [vmem:[%s208 + $0x28] sm:$0xff] %vm756, %v1267
      %1284 = vst.msk [vmem:[%s208 + $0x30] sm:$0xff] %vm756, %v1268
      %1285 = vst.msk [vmem:[%s208 + $0x38] sm:$0xff] %vm756, %v1269
      %1286 = vst.msk [vmem:[%s208 + $0x40] sm:$0xff] %vm756, %v1270
      %1287 = vst.msk [vmem:[%s208 + $0x48] sm:$0xff] %vm756, %v1271
      %1288 = vst.msk [vmem:[%s208 + $0x50] sm:$0xff] %vm756, %v1272
      %1289 = vst.msk [vmem:[%s208 + $0x58] sm:$0xff] %vm756, %v1273
      %1290 = vst.msk [vmem:[%s208 + $0x60] sm:$0xff] %vm756, %v1274
      %1291 = vst.msk [vmem:[%s208 + $0x68] sm:$0xff] %vm756, %v1275
      %1292 = vst.msk [vmem:[%s208 + $0x70] sm:$0xff] %vm756, %v1276
      %1293 = vst.msk [vmem:[%s208 + $0x78] sm:$0xff] %vm756, %v1277
      %s1294 = smul.u32 8, %s19
      %p1295 = scmp.lt.s32.totalorder %s18, 1
      %s1296 = scalar_select %p1295, %s18, 1
      %p1297 = scmp.lt.s32.totalorder %s1294, 15
      %s1298 = scalar_select %p1297, %s1294, 15
      %s1299 = smul.addr %s1298, 2
      %s1300 = smul.addr %s1296, 32
      %s1301 = sadd.s32 %s1299, %s1300
      %s1302 = smul.addr %s1301, 8
      %s1303 = scalar_lea.vmem %s3, %s1302
      // Predicated region
      $region33: #{gated_residual_block.1} parent=31 // pred_check
        %p1304 = pneg %p116
      $region34: #{gated_residual_block.1} parent=31 // pred_check_branch
        %1306 = sbr.rel (%p1304) target = $region36
      $region35: #{gated_residual_block.1} parent=31 // pred_region
        %s1307 = smul.u32 8, %s19
      $region36: #{gated_residual_block.1} parent=31 // pred_fallthru
        _
    $region32: #{gated_residual_block.1} parent=5 // pred_fallthru
      _
    %p1308 = scmp.le.s32.totalorder 2, %s9
    // Predicated region
    $region37: #{gated_residual_block.1} parent=5 // pred_check
      %p1309 = pneg %p1308
    $region38: #{gated_residual_block.1} parent=5 // pred_check_branch
      %1311 = sbr.rel (%p1309) target = $region40
    $region39: #{gated_residual_block.1} parent=5 // pred_region
      %s1312 = ssub.s32 %s9, 2
      // Predicated region
      $region41: #{gated_residual_block.1} parent=39 // pred_check
        %p1313 = pneg %p122
      $region42: #{gated_residual_block.1} parent=39 // pred_check_branch
        %1315 = sbr.rel (%p1313) target = $region44
      $region43: #{gated_residual_block.1} parent=39 // pred_region
        %s1316 = smul.u32 8, %s21
        %p1317 = scmp.lt.s32.totalorder %s20, 1
        %s1318 = scalar_select %p1317, %s20, 1
        %p1319 = scmp.lt.s32.totalorder %s1316, 15
        %s1320 = scalar_select %p1319, %s1316, 15
        %s1321 = smul.addr %s1320, 2
        %s1322 = smul.addr %s1318, 32
        %s1323 = sadd.s32 %s1321, %s1322
        %s1324 = smul.addr %s1323, 8
        %s1325 = scalar_lea.vmem %s3, %s1324
      $region44: #{gated_residual_block.1} parent=39 // pred_fallthru
        _
    $region40: #{gated_residual_block.1} parent=5 // pred_fallthru
      _
  $region6: #{gated_residual_block.1} parent=0 // loop_footer
    %s13 = sadd.s32 1, %s9
  $region7: #{gated_residual_block.1} parent=0 // loop_footer_branch
    %8 = sbr.rel target = $region3
  $region8: #{gated_residual_block.1} parent=0 // loop_exit
    _

</llo_original>
